<compile_context>
chip_gen: v7x
topology: tpu7x:2x2x1
jax: 0.10.0
libtpu: 0.0.40
codegen_flags: <defaults>
</compile_context>

<pallas_src>
import math

import jax
import jax.numpy as jnp
from jax.experimental import pallas as pl
from jax.experimental.pallas import tpu as pltpu


def masknet_kernel(x_ref, w_ref, b_ref, o_ref):
    # out = -W * (x - b) == W * (b - x)   (2 VPU ops instead of 3)
    o_ref[...] = w_ref[...] * (b_ref[...] - x_ref[...])


def _round_up(n, m):
    return -(-n // m) * m


def masknet_forward(x, W, b, *, target_tile_bytes=6 * 1024 * 1024):
    """Pallas implementation of MaskNet.forward: -W * (x - b).

    Args:
        x: (batch, input_dim)
        W: (1, input_dim)
        b: (1, input_dim)
        target_tile_bytes: approx per-buffer VMEM budget for the x/out tiles
            (clamped to [64 KiB, 8 MiB] so 4 double-buffered tiles fit v7x VMEM).
    Returns:
        (batch, input_dim), same dtype as x.  (W/b are computed in x's dtype.)
    """
    batch, input_dim = x.shape
    assert W.shape == (1, input_dim)
    assert b.shape == (1, input_dim)
    dtype = x.dtype
    itemsize = jnp.dtype(dtype).itemsize
    W = W.astype(dtype)
    b = b.astype(dtype)

    # Sublane multiple for this dtype (sub-32-bit types pack along sublanes).
    sublane = {1: 32, 2: 16, 4: 8}.get(itemsize, 8)

    # ---- lane-dense folding: make the last dim a multiple of 128 -----------------
    MAX_LANE_WIDTH = 8192  # keep min block + granularity sane (guards odd/wide dims)
    if input_dim % 128 == 0:
        fold = 1
    else:
        fold = 128 // math.gcd(input_dim, 128)
        if fold * input_dim > MAX_LANE_WIDTH:
            fold = 1  # fallback: full-extent lane dim (masked tail stores, bounded VMEM)
    lane_width = fold * input_dim

    if fold > 1:
        w_lane = jnp.tile(W, (1, fold))
        b_lane = jnp.tile(b, (1, fold))
        folded_rows = -(-batch // fold)            # ceil(batch / fold)
        pad = folded_rows * fold - batch           # at most fold-1 rows
        if pad:
            x = jnp.pad(x, ((0, pad), (0, 0)))
        x_lane = x.reshape(folded_rows, lane_width)
    else:
        w_lane, b_lane = W, b
        folded_rows = batch
        x_lane = x                                  # no wrapper-side copy at all

    # ---- pick the batch (sublane) tile --------------------------------------------
    tgt = int(min(max(target_tile_bytes, 64 * 1024), 8 * 1024 * 1024))
    row_bytes = lane_width * itemsize
    max_rows = max((tgt // row_bytes) // sublane * sublane, sublane)

    if folded_rows <= sublane:
        block_rows = folded_rows                    # single full-extent block
    elif folded_rows <= max_rows:
        # Fits one tile, but split into >=2 blocks so both v7x TensorCores stream.
        block_rows = min(_round_up(-(-folded_rows // 2), sublane), max_rows)
    else:
        block_rows = max_rows
    grid = (pl.cdiv(folded_rows, block_rows),)      # masked edge block, no over-padding

    # VMEM budget: 2x(x) + 2x(out) blocks + 2x(W) + 2x(b) + slack; portable cap.
    block_bytes = block_rows * row_bytes
    vmem_limit = int(min(max(4 * block_bytes + 4 * row_bytes + (4 << 20), 16 << 20), 40 << 20))

    out_lane = pl.pallas_call(
        masknet_kernel,
        out_shape=jax.ShapeDtypeStruct((folded_rows, lane_width), dtype),
        grid_spec=pltpu.PrefetchScalarGridSpec(
            num_scalar_prefetch=0,
            grid=grid,
            in_specs=[
                pl.BlockSpec((block_rows, lane_width), lambda i: (i, 0)),
                pl.BlockSpec((1, lane_width), lambda i: (0, 0)),  # constant block
                pl.BlockSpec((1, lane_width), lambda i: (0, 0)),  # constant block
            ],
            out_specs=pl.BlockSpec((block_rows, lane_width), lambda i: (i, 0)),
        ),
        compiler_params=pltpu.CompilerParams(
            dimension_semantics=("parallel",),      # shard batch grid across TCs (v7x)
            vmem_limit_bytes=vmem_limit,
        ),
    )(x_lane, w_lane, b_lane)

    if fold > 1:
        out = out_lane.reshape(folded_rows * fold, input_dim)
        return out[:batch] if folded_rows * fold != batch else out
    return out_lane


if __name__ == "__main__":
    key = jax.random.PRNGKey(0)

    # --- 1) small case consistent with the module: fold=4, single full-extent block --
    batch, input_dim = 8, 32
    kx, kw, kb = jax.random.split(key, 3)
    x = jax.random.normal(kx, (batch, input_dim), dtype=jnp.float32)
    # PyTorch __init__ uses zeros; use small random values so the math path is exercised.
    W = jax.random.normal(kw, (1, input_dim), dtype=jnp.float32) * 0.1
    b = jax.random.normal(kb, (1, input_dim), dtype=jnp.float32) * 0.1

    out = masknet_forward(x, W, b)
    jax.block_until_ready(out)
    ref = -W * (x - b)
    assert out.shape == (batch, input_dim)
    assert jnp.allclose(out, ref, atol=1e-6, rtol=1e-6)

    # --- 2) ragged batch + fold>1, tiny tile -> multi-step grid + masked edge block ---
    batch2, input_dim2 = 1037, 48
    k2x, k2w, k2b = jax.random.split(jax.random.PRNGKey(1), 3)
    x2 = jax.random.normal(k2x, (batch2, input_dim2), dtype=jnp.float32)
    W2 = jax.random.normal(k2w, (1, input_dim2), dtype=jnp.float32) * 0.1
    b2 = jax.random.normal(k2b, (1, input_dim2), dtype=jnp.float32) * 0.1

    out2 = masknet_forward(x2, W2, b2, target_tile_bytes=64 * 1024)
    jax.block_until_ready(out2)
    ref2 = -W2 * (x2 - b2)
    assert out2.shape == (batch2, input_dim2)
    assert jnp.allclose(out2, ref2, atol=1e-6, rtol=1e-6)

    # --- 3) odd input_dim -> fold-cap fallback (full-extent lane dim), 2-way split ----
    batch3, input_dim3 = 19, 131
    k3x, k3w, k3b = jax.random.split(jax.random.PRNGKey(2), 3)
    x3 = jax.random.normal(k3x, (batch3, input_dim3), dtype=jnp.float32)
    W3 = jax.random.normal(k3w, (1, input_dim3), dtype=jnp.float32) * 0.1
    b3 = jax.random.normal(k3b, (1, input_dim3), dtype=jnp.float32) * 0.1

    out3 = masknet_forward(x3, W3, b3)
    jax.block_until_ready(out3)
    ref3 = -W3 * (x3 - b3)
    assert out3.shape == (batch3, input_dim3)
    assert jnp.allclose(out3, ref3, atol=1e-6, rtol=1e-6)

    print("KERNEL_OK")
</pallas_src>

<mosaic_0001>
module attributes {stable_mosaic.version = 11 : i64} {
  func.func @masknet_kernel(%arg0: i32, %arg1: memref<2x128xf32, #tpu.memory_space<vmem>>, %arg2: memref<1x128xf32, #tpu.memory_space<vmem>>, %arg3: memref<1x128xf32, #tpu.memory_space<vmem>>, %arg4: memref<2x128xf32, #tpu.memory_space<vmem>>) attributes {dimension_semantics = [#tpu.dimension_semantics<parallel>], iteration_bounds = array<i64: 1>, scalar_prefetch = 0 : i64, scratch_operands = 0 : i64, tpu.core_type = #tpu.core_type<tc>, window_params = [{transform_indices = @transform_0, window_bounds = array<i64: 2, 128>}, {pipeline_mode = #tpu.pipeline_mode<synchronous>, transform_indices = @transform_1, window_bounds = array<i64: 1, 128>}, {pipeline_mode = #tpu.pipeline_mode<synchronous>, transform_indices = @transform_2, window_bounds = array<i64: 1, 128>}, {transform_indices = @transform_3, window_bounds = array<i64: 2, 128>}]} {
    %c0 = arith.constant 0 : index
    %c0_0 = arith.constant 0 : index
    %0 = vector.load %arg2[%c0, %c0_0] : memref<1x128xf32, #tpu.memory_space<vmem>>, vector<1x128xf32>
    %c0_1 = arith.constant 0 : index
    %c0_2 = arith.constant 0 : index
    %1 = vector.load %arg3[%c0_1, %c0_2] : memref<1x128xf32, #tpu.memory_space<vmem>>, vector<1x128xf32>
    %c0_3 = arith.constant 0 : index
    %c0_4 = arith.constant 0 : index
    %2 = vector.load %arg1[%c0_3, %c0_4] : memref<2x128xf32, #tpu.memory_space<vmem>>, vector<2x128xf32>
    %3 = vector.broadcast %1 : vector<1x128xf32> to vector<2x128xf32>
    %4 = arith.subf %3, %2 : vector<2x128xf32>
    %5 = vector.broadcast %0 : vector<1x128xf32> to vector<2x128xf32>
    %6 = arith.mulf %5, %4 : vector<2x128xf32>
    %c0_5 = arith.constant 0 : index
    %c0_6 = arith.constant 0 : index
    %7 = vector.load %arg4[%c0_5, %c0_6] : memref<2x128xf32, #tpu.memory_space<vmem>>, vector<2x128xf32>
    tpu.vector_store %arg4[%c0_5, %c0_6], %6 {strides = array<i32>} : memref<2x128xf32, #tpu.memory_space<vmem>>, vector<2x128xf32>,
    return
  }
  func.func @transform_0(%arg0: i32) -> (i32, i32) {
    %c0_i32 = arith.constant 0 : i32
    %c0_i32_0 = arith.constant 0 : i32
    return %arg0, %c0_i32 : i32, i32
  }
  func.func @transform_1(%arg0: i32) -> (i32, i32) {
    %c0_i32 = arith.constant 0 : i32
    %c0_i32_0 = arith.constant 0 : i32
    %c0_i32_1 = arith.constant 0 : i32
    return %c0_i32, %c0_i32_0 : i32, i32
  }
  func.func @transform_2(%arg0: i32) -> (i32, i32) {
    %c0_i32 = arith.constant 0 : i32
    %c0_i32_0 = arith.constant 0 : i32
    %c0_i32_1 = arith.constant 0 : i32
    return %c0_i32, %c0_i32_0 : i32, i32
  }
  func.func @transform_3(%arg0: i32) -> (i32, i32) {
    %c0_i32 = arith.constant 0 : i32
    %c0_i32_0 = arith.constant 0 : i32
    return %arg0, %c0_i32 : i32, i32
  }
}

</mosaic_0001>

<llo_original>
// kernel: tpu_custom_call.1
$region0: #{tpu_custom_call.1}
  #allocation0 [shape = 'u32[]', space=smem, size = 0x4, offset = 0x4, fixed_abs, tag = 'smem constant byte address 0x4 - core index']
  #allocation1 [shape = 'u32[144,128]{1,0:T(1,128)}', space=vmem, size = 0x12000, scoped, tag = 'internal scratch']
  %s0 = inlined_call_operand.hbm [shape: f32[2,128], index: 0, kind: input, shape index: {}]
  %s1 = inlined_call_operand.vmem [shape: f32[1,128], index: 1, kind: input, shape index: {}]
  %s2 = inlined_call_operand.vmem [shape: f32[1,128], index: 2, kind: input, shape index: {}]
  %s3 = inlined_call_operand.hbm [shape: f32[2,128], index: 3, kind: output, shape index: {}]
  %s4 = sld [smem:[#allocation0]]
  $region26: #{tpu_custom_call.1} parent=0
    _
  %s6 = ssub.s32 1, %s4
  %s7 = scalar_select 0, %s6, %s4
  $region1: #{tpu_custom_call.1} parent=0
    #allocation2 [shape = 'u8[1024]{0}', space=vmem, size = 0x400, scoped, tag = 'input window, operand 0, single buffered']
    #allocation3 [shape = 's32[1]{0}', space=sflag, size = 0x4, scoped, tag = 'scoped memory for tpu_custom_call.1']
    #allocation4 [shape = 's32[1]{0}', space=sflag, size = 0x4, scoped, tag = 'scoped memory for tpu_custom_call.1']
    #allocation5 [shape = 'u8[1024]{0}', space=vmem, size = 0x400, scoped, tag = 'output window, operand 0, single buffered']
    %8 = vsyncpa [#allocation3], 0
    %9 = vsyncpa [#allocation4], 0
    // Predicated region
    $region2: #{tpu_custom_call.1} parent=1 // pred_check
      _
    $region3: #{tpu_custom_call.1} parent=1 // pred_check_branch
      %11 = sbr.rel (0) target = $region5
    $region4: #{tpu_custom_call.1} parent=1 // pred_region
      %s13 = ssub.s32 32, 32
      %14 = vsyncadd [#allocation3], %s13
      %s16 = sshll.u32 [#allocation2], 4
      %s17 = int_to_ptr.vmem [resolvable:$true] %s16
      %19 = dma.hbm_to_vmem [thread:$0]  %s0, 32, %s17, [#allocation3]
    $region5: #{tpu_custom_call.1} parent=1 // pred_fallthru
      _
    // Predicated region
    $region6: #{tpu_custom_call.1} parent=1 // pred_check
      _
    $region7: #{tpu_custom_call.1} parent=1 // pred_check_branch
      %21 = sbr.rel (0) target = $region9
    $region8: #{tpu_custom_call.1} parent=1 // pred_region
      _
    $region9: #{tpu_custom_call.1} parent=1 // pred_fallthru
      _
    // Predicated region
    $region10: #{tpu_custom_call.1} parent=1 // pred_check
      _
    $region11: #{tpu_custom_call.1} parent=1 // pred_check_branch
      %23 = sbr.rel (0) target = $region13
    $region12: #{tpu_custom_call.1} parent=1 // pred_region
      _
    $region13: #{tpu_custom_call.1} parent=1 // pred_fallthru
      _
    // Predicated region
    $region14: #{tpu_custom_call.1} parent=1 // pred_check
      _
    $region15: #{tpu_custom_call.1} parent=1 // pred_check_branch
      %25 = sbr.rel (0) target = $region17
    $region16: #{tpu_custom_call.1} parent=1 // pred_region
      %26 = dma.done [#allocation3], 32
    $region17: #{tpu_custom_call.1} parent=1 // pred_fallthru
      _
    %v27 = vld [vmem:[%s1] sm:$0x1]
    %v28 = vld [vmem:[%s2] sm:$0x1]
    %v29 = vld [vmem:[#allocation2] sm:$0x3]
    %v31 = vlaneseq
    %v32 = vshrl.u32 %v31, 7
    %v33 = vsub.s32 0, %v32
    %v34 = vrot.slane %v28, %v33
    %v36 = vsub.f32 %v34, %v29
    %v38 = vlaneseq
    %v39 = vshrl.u32 %v38, 7
    %v40 = vsub.s32 0, %v39
    %v41 = vrot.slane %v27, %v40
    %v43 = vmul.f32 %v41, %v36
    %44 = vst [vmem:[#allocation5] sm:$0x3] %v43
    // Predicated region
    $region18: #{tpu_custom_call.1} parent=1 // pred_check
      _
    $region19: #{tpu_custom_call.1} parent=1 // pred_check_branch
      %46 = sbr.rel (0) target = $region21
    $region20: #{tpu_custom_call.1} parent=1 // pred_region
      %s48 = ssub.s32 32, 32
      %49 = vsyncadd [#allocation4], %s48
      %s51 = sshll.u32 [#allocation5], 4
      %s52 = int_to_ptr.vmem [resolvable:$true] %s51
      %54 = dma.vmem_to_hbm [thread:$0]  %s52, 32, %s3, [#allocation4]
    $region21: #{tpu_custom_call.1} parent=1 // pred_fallthru
      _
    // Predicated region
    $region22: #{tpu_custom_call.1} parent=1 // pred_check
      _
    $region23: #{tpu_custom_call.1} parent=1 // pred_check_branch
      %56 = sbr.rel (0) target = $region25
    $region24: #{tpu_custom_call.1} parent=1 // pred_region
      %57 = dma.done [#allocation4], 32
    $region25: #{tpu_custom_call.1} parent=1 // pred_fallthru
      _
    %58 = vsyncpa [#allocation3], 1
    %59 = vsyncpa [#allocation4], 1

</llo_original>
